<compile_context>
chip_gen: v5e
topology: v5e:2x2
jax: 0.10.0
libtpu: 0.0.40
codegen_flags: <defaults>
</compile_context>

<pallas_src>
import functools

import jax
import jax.numpy as jnp
from jax.experimental import pallas as pl
from jax.experimental.pallas import tpu as pltpu

LANE = 128


def _round_up(x, m):
    return (x + m - 1) // m * m


# ----------------------------------------------------------------------------- kernel
def _vae_encoder_kernel(*refs, out_p, training):
    """One (batch tile, hid chunk) grid step.

    fc1 is chunked along its output (hid) dim and the fused fc21|fc22 along its
    input dim; partial products accumulate into acc_ref.  Chunked ReLU is exact
    because each h column depends only on its own w1 column / b1 entry.
    """
    if training:
        (x_ref, w1_ref, b1_ref, w2_ref, b2_ref, eps_ref,
         z_ref, mu_ref, lv_ref, acc_ref) = refs
    else:
        (x_ref, w1_ref, b1_ref, w2_ref, b2_ref,
         mu_ref, lv_ref, acc_ref) = refs

    k = pl.program_id(1)

    @pl.when(k == 0)
    def _():
        acc_ref[...] = jnp.zeros_like(acc_ref)

    # fc1 chunk + bias + ReLU (MXU, f32 accumulate; elementwise in f32)
    h = jnp.dot(x_ref[...], w1_ref[...], preferred_element_type=jnp.float32)
    h = jnp.maximum(h + b1_ref[...], 0.0)

    # fused fc21|fc22 partial product -> (TB, 2*out_p) f32 accumulator
    acc_ref[...] += jnp.dot(h.astype(w2_ref.dtype), w2_ref[...],
                            preferred_element_type=jnp.float32)

    @pl.when(k == pl.num_programs(1) - 1)
    def _():
        ml = acc_ref[...] + b2_ref[...]
        mu = ml[:, :out_p]
        logvar = ml[:, out_p:]
        mu_ref[...] = mu.astype(mu_ref.dtype)
        lv_ref[...] = logvar.astype(lv_ref.dtype)
        if training:
            std = jnp.exp(0.5 * logvar)                  # EUP slot
            z_ref[...] = (eps_ref[...] * std + mu).astype(z_ref.dtype)


# ----------------------------------------------------------------------------- packing
def _suggest_hid_chunk(in_p, hid_p, out_p, itemsz, budget_bytes=24 << 20):
    """Largest hid chunk whose resident fc1/fc2 weight slabs stay under budget."""
    per_row = (in_p + 2 * out_p) * itemsz + 4           # w1 col + w2 row + b1 entry
    if hid_p * per_row + 2 * out_p * 4 <= budget_bytes:
        return hid_p                                    # fully resident, 1 buffer
    hk = (budget_bytes // (2 * per_row)) // LANE * LANE  # 2 buffers when chunked
    return int(min(max(hk, LANE), hid_p))


def pack_params(params, *, matmul_dtype=jnp.bfloat16, hid_chunk=None,
                weight_vmem_budget=24 << 20):
    """One-time pad + fuse of the VAEEncoder weights for the Pallas kernel.

    Call once and reuse across steps (re-packing every forward would re-stream
    all weights through HBM).  Returns a dict:
      w1 (in_p, hid_p), b1 (1, hid_p), w2 (hid_p, 2*out_p)=[w21|w22],
      b2 (1, 2*out_p)=[b21|b22].
    If you pass a custom hid_chunk / budget here, pass the same hid_chunk to
    vae_encoder_forward.
    """
    mm_dt = jax.dtypes.canonicalize_dtype(matmul_dtype)
    in_dim, hid_dim = params["w1"].shape
    out_dim = params["w21"].shape[1]
    in_p = _round_up(in_dim, LANE)
    hid_p = _round_up(hid_dim, LANE)
    out_p = _round_up(out_dim, LANE)
    if hid_chunk is None:
        hid_chunk = _suggest_hid_chunk(in_p, hid_p, out_p, mm_dt.itemsize,
                                       weight_vmem_budget)
    hid_chunk = _round_up(min(hid_chunk, hid_p), LANE)
    hid_p = _round_up(hid_p, hid_chunk)                 # grid-divisible hid

    def pad2(a, rows, cols, dt):
        a = jnp.asarray(a, dt)
        return jnp.pad(a, ((0, rows - a.shape[0]), (0, cols - a.shape[1])))

    return dict(
        w1=pad2(params["w1"], in_p, hid_p, mm_dt),
        b1=pad2(params["b1"], 1, hid_p, jnp.float32),
        w2=jnp.concatenate([pad2(params["w21"], hid_p, out_p, mm_dt),
                            pad2(params["w22"], hid_p, out_p, mm_dt)], axis=1),
        b2=jnp.concatenate([pad2(params["b21"], 1, out_p, jnp.float32),
                            pad2(params["b22"], 1, out_p, jnp.float32)], axis=1),
    )


# ----------------------------------------------------------------------------- wrapper
@functools.partial(jax.jit,
                   static_argnames=("out_dim", "training", "hid_chunk", "out_dtype"))
def vae_encoder_forward(x, packed, eps=None, *, out_dim, training=True,
                        hid_chunk=None, out_dtype=jnp.float32):
    """VAEEncoder forward in one Pallas kernel.

    x:      (B, in_dim) f32          packed: output of pack_params()
    eps:    (B, out_dim) f32 noise (required iff training=True)
    out_dim: true latent dim (static) -- padding is sliced off the outputs.
    """
    if training and eps is None:
        raise ValueError("training=True requires eps")

    w1, b1, w2, b2 = packed["w1"], packed["b1"], packed["w2"], packed["b2"]
    in_p, hid_p = w1.shape
    out_p = w2.shape[1] // 2
    mm_dt = w1.dtype
    itemsz = mm_dt.itemsize
    out_dt = jax.dtypes.canonicalize_dtype(out_dtype)
    B = x.shape[0]

    # --- hid chunking (K-tiling) keeps resident weights within VMEM (v7x) ----
    if hid_chunk is None:
        hid_chunk = _suggest_hid_chunk(in_p, hid_p, out_p, itemsz)
    hid_chunk = min(_round_up(hid_chunk, LANE), hid_p)
    if hid_p % hid_chunk:                               # safety: pick a divisor
        hid_chunk = next(c for c in range(hid_chunk, 0, -LANE) if hid_p % c == 0)
    n_k = hid_p // hid_chunk

    # --- batch tiling: dtype-aware rounding, 2-TC split, big-batch TB bump ----
    min_rows = 16 if itemsz < 4 else 8                  # bf16 packs 16 rows/sublane grp
    TB = 256
    if B < TB:
        b_small = _round_up(max(B, min_rows), min_rows)
        # split a lone tile in two so both TensorCores get work (v7x megacore)
        TB = _round_up((b_small + 1) // 2, min_rows) if b_small >= 32 else b_small
    elif B >= 4096:
        TB = 512                                        # fewer grid steps / DMAs
    B_pad = _round_up(B, TB)

    def vmem_budget(tb):
        w_buf = 1 if n_k == 1 else 2                    # Buffered(1) when resident
        wbytes = w_buf * ((in_p + 2 * out_p) * hid_chunk * itemsz + hid_chunk * 4)
        wbytes += 2 * out_p * 4                         # b2 (single buffer)
        s = 2 * tb * in_p * itemsz                      # x stream (double buffered)
        if training:
            s += 2 * tb * out_p * 4                     # eps stream
        s += 2 * (3 if training else 2) * tb * out_p * out_dt.itemsize
        return wbytes + s + tb * 2 * out_p * 4          # + acc scratch

    if TB > 256 and vmem_budget(TB) > (40 << 20):
        TB = 256
        B_pad = _round_up(B, TB)
    n_tiles = B_pad // TB
    vmem_limit = int(min(max(1.5 * vmem_budget(TB) + (4 << 20), 16 << 20), 64 << 20))

    # --- per-call activation padding (weights were packed once, offline) ------
    x_p = jnp.pad(jnp.asarray(x, mm_dt),
                  ((0, B_pad - B), (0, in_p - x.shape[1])))

    row = lambda i, k: (i, 0)
    resident = pl.Buffered(1)                           # single-buffer constant blocks
    w_mode = resident if n_k == 1 else None

    in_specs = [
        pl.BlockSpec((TB, in_p), row),
        pl.BlockSpec((in_p, hid_chunk), lambda i, k: (0, k), pipeline_mode=w_mode),
        pl.BlockSpec((1, hid_chunk), lambda i, k: (0, k), pipeline_mode=w_mode),
        pl.BlockSpec((hid_chunk, 2 * out_p), lambda i, k: (k, 0), pipeline_mode=w_mode),
        pl.BlockSpec((1, 2 * out_p), lambda i, k: (0, 0), pipeline_mode=resident),
    ]
    args = [x_p, w1, b1, w2, b2]
    if training:
        eps_p = jnp.pad(jnp.asarray(eps, jnp.float32),
                        ((0, B_pad - B), (0, out_p - eps.shape[1])))
        in_specs.append(pl.BlockSpec((TB, out_p), row))
        args.append(eps_p)

    n_out = 3 if training else 2                        # eval: only [mu, logvar]
    out_shape = tuple(jax.ShapeDtypeStruct((B_pad, out_p), out_dt)
                      for _ in range(n_out))
    out_specs = tuple(pl.BlockSpec((TB, out_p), row) for _ in range(n_out))

    cost = pl.CostEstimate(
        flops=2 * B_pad * hid_p * (in_p + 2 * out_p),
        transcendentals=B_pad * out_p if training else 0,
        bytes_accessed=(B_pad * in_p * itemsz
                        + (in_p + 2 * out_p) * hid_p * itemsz
                        + (hid_p + 2 * out_p) * 4
                        + (B_pad * out_p * 4 if training else 0)
                        + n_out * B_pad * out_p * out_dt.itemsize),
    )

    kernel = functools.partial(_vae_encoder_kernel, out_p=out_p, training=training)
    outs = pl.pallas_call(
        kernel,
        out_shape=out_shape,
        grid=(n_tiles, n_k),
        in_specs=in_specs,
        out_specs=out_specs,
        scratch_shapes=[pltpu.VMEM((TB, 2 * out_p), jnp.float32)],
        compiler_params=pltpu.CompilerParams(
            dimension_semantics=("parallel", "arbitrary"),
            vmem_limit_bytes=vmem_limit),
        cost_estimate=cost,
    )(*args)

    if training:
        z_p, mu_p, lv_p = outs
        z = z_p[:B, :out_dim]
    else:
        mu_p, lv_p = outs
    mu = mu_p[:B, :out_dim]
    logvar = lv_p[:B, :out_dim]
    if not training:
        z = mu                                          # eval: z aliases mu
    return z, mu, logvar


# ----------------------------------------------------------------------------- helpers
def init_params(key, in_dim, hid_dim, out_dim):
    """nn.Linear-style init: U(-1/sqrt(fan_in), 1/sqrt(fan_in))."""
    ks = jax.random.split(key, 6)

    def lin(kw, kb, fan_in, fan_out):
        bound = 1.0 / jnp.sqrt(fan_in)
        w = jax.random.uniform(kw, (fan_in, fan_out), jnp.float32, -bound, bound)
        b = jax.random.uniform(kb, (1, fan_out), jnp.float32, -bound, bound)
        return w, b

    w1, b1 = lin(ks[0], ks[1], in_dim, hid_dim)
    w21, b21 = lin(ks[2], ks[3], hid_dim, out_dim)
    w22, b22 = lin(ks[4], ks[5], hid_dim, out_dim)
    return dict(w1=w1, b1=b1, w21=w21, b21=b21, w22=w22, b22=b22)


def reference_forward(x, params, eps, training=True, mm_dtype=jnp.float32):
    """Pure-JAX reference mirroring the kernel's cast pattern."""
    xm = x.astype(mm_dtype)
    h = jnp.dot(xm, params["w1"].astype(mm_dtype),
                preferred_element_type=jnp.float32) + params["b1"]
    h = jnp.maximum(h, 0.0)
    hm = h.astype(mm_dtype)
    mu = jnp.dot(hm, params["w21"].astype(mm_dtype),
                 preferred_element_type=jnp.float32) + params["b21"]
    logvar = jnp.dot(hm, params["w22"].astype(mm_dtype),
                     preferred_element_type=jnp.float32) + params["b22"]
    z = eps * jnp.exp(0.5 * logvar) + mu if training else mu
    return z, mu, logvar


# ----------------------------------------------------------------------------- demo
if __name__ == "__main__":
    B, IN_DIM, HID_DIM, OUT_DIM = 8, 32, 64, 16

    key = jax.random.PRNGKey(0)
    k_x, k_eps, k_params, k_x2, k_eps2, k_params2 = jax.random.split(key, 6)

    x = jax.random.normal(k_x, (B, IN_DIM), dtype=jnp.float32)
    eps = jax.random.normal(k_eps, (B, OUT_DIM), dtype=jnp.float32)
    params = init_params(k_params, IN_DIM, HID_DIM, OUT_DIM)

    # 1) f32 MXU operands: strict check against reference (training mode)
    packed_f32 = pack_params(params, matmul_dtype=jnp.float32)
    z, mu, lv = vae_encoder_forward(x, packed_f32, eps, out_dim=OUT_DIM,
                                    training=True)
    jax.block_until_ready((z, mu, lv))
    z_r, mu_r, lv_r = reference_forward(x, params, eps, training=True)
    assert jnp.allclose(z, z_r, atol=1e-5, rtol=1e-5)
    assert jnp.allclose(mu, mu_r, atol=1e-5, rtol=1e-5)
    assert jnp.allclose(lv, lv_r, atol=1e-5, rtol=1e-5)

    # 2) eval mode: z == mu, only [mu|logvar] written by the kernel
    z_e, mu_e, lv_e = vae_encoder_forward(x, packed_f32, out_dim=OUT_DIM,
                                          training=False)
    jax.block_until_ready((z_e, mu_e, lv_e))
    assert jnp.allclose(z_e, mu_e)
    assert jnp.allclose(mu_e, mu_r, atol=1e-5, rtol=1e-5)
    assert jnp.allclose(lv_e, lv_r, atol=1e-5, rtol=1e-5)

    # 3) default bf16 MXU operand path (f32 accumulate / elementwise)
    packed_bf16 = pack_params(params)                   # matmul_dtype=bfloat16
    z_b, mu_b, lv_b = vae_encoder_forward(x, packed_bf16, eps, out_dim=OUT_DIM,
                                          training=True)
    jax.block_until_ready((z_b, mu_b, lv_b))
    z_br, mu_br, lv_br = reference_forward(x, params, eps, training=True,
                                           mm_dtype=jnp.bfloat16)
    assert jnp.allclose(z_b, z_br, atol=2e-2, rtol=2e-2)
    assert jnp.allclose(mu_b, mu_br, atol=2e-2, rtol=2e-2)
    assert jnp.allclose(lv_b, lv_br, atol=2e-2, rtol=2e-2)

    # 4) forced K-tiling over hid (accumulator path), f32, hid=256 chunk=128
    B2, IN2, HID2, OUT2 = 12, 48, 256, 24
    x2 = jax.random.normal(k_x2, (B2, IN2), dtype=jnp.float32)
    eps2 = jax.random.normal(k_eps2, (B2, OUT2), dtype=jnp.float32)
    params2 = init_params(k_params2, IN2, HID2, OUT2)
    packed2 = pack_params(params2, matmul_dtype=jnp.float32, hid_chunk=128)
    z2, mu2, lv2 = vae_encoder_forward(x2, packed2, eps2, out_dim=OUT2,
                                       training=True, hid_chunk=128)
    jax.block_until_ready((z2, mu2, lv2))
    z2_r, mu2_r, lv2_r = reference_forward(x2, params2, eps2, training=True)
    assert jnp.allclose(z2, z2_r, atol=1e-5, rtol=1e-5)
    assert jnp.allclose(mu2, mu2_r, atol=1e-5, rtol=1e-5)
    assert jnp.allclose(lv2, lv2_r, atol=1e-5, rtol=1e-5)

    print("KERNEL_OK")
</pallas_src>

<mosaic_0001>
module attributes {stable_mosaic.version = 11 : i64} {
  func.func @_vae_encoder_kernel(%arg0: i32, %arg1: i32, %arg2: memref<8x128xf32, #tpu.memory_space<vmem>>, %arg3: memref<128x128xf32, #tpu.memory_space<vmem>>, %arg4: memref<1x128xf32, #tpu.memory_space<vmem>>, %arg5: memref<128x256xf32, #tpu.memory_space<vmem>>, %arg6: memref<1x256xf32, #tpu.memory_space<vmem>>, %arg7: memref<8x128xf32, #tpu.memory_space<vmem>>, %arg8: memref<8x128xf32, #tpu.memory_space<vmem>>, %arg9: memref<8x128xf32, #tpu.memory_space<vmem>>, %arg10: memref<8x128xf32, #tpu.memory_space<vmem>>, %arg11: memref<8x256xf32, #tpu.memory_space<vmem>>) attributes {dimension_semantics = [#tpu.dimension_semantics<parallel>, #tpu.dimension_semantics<arbitrary>], iteration_bounds = array<i64: 1, 1>, scalar_prefetch = 0 : i64, scratch_operands = 1 : i64, tpu.core_type = #tpu.core_type<tc>, window_params = [{transform_indices = @transform_0, window_bounds = array<i64: 8, 128>}, {pipeline_mode = #tpu.pipeline_mode<synchronous>, transform_indices = @transform_1, window_bounds = array<i64: 128, 128>}, {pipeline_mode = #tpu.pipeline_mode<synchronous>, transform_indices = @transform_2, window_bounds = array<i64: 1, 128>}, {pipeline_mode = #tpu.pipeline_mode<synchronous>, transform_indices = @transform_3, window_bounds = array<i64: 128, 256>}, {pipeline_mode = #tpu.pipeline_mode<synchronous>, transform_indices = @transform_4, window_bounds = array<i64: 1, 256>}, {transform_indices = @transform_5, window_bounds = array<i64: 8, 128>}, {transform_indices = @transform_6, window_bounds = array<i64: 8, 128>}, {transform_indices = @transform_7, window_bounds = array<i64: 8, 128>}, {transform_indices = @transform_8, window_bounds = array<i64: 8, 128>}]} {
    %c0_i32 = arith.constant 0 : i32
    %0 = arith.cmpi eq, %arg1, %c0_i32 : i32
    %1 = arith.extui %0 : i1 to i32
    %c0_i32_0 = arith.constant 0 : i32
    %2 = arith.cmpi ne, %1, %c0_i32_0 : i32
    scf.if %2 {
      %cst_16 = arith.constant 0.000000e+00 : f32
      %19 = vector.broadcast %cst_16 : f32 to vector<8x256xf32>
      %c0_17 = arith.constant 0 : index
      %c0_18 = arith.constant 0 : index
      %20 = vector.load %arg11[%c0_17, %c0_18] : memref<8x256xf32, #tpu.memory_space<vmem>>, vector<8x256xf32>
      tpu.vector_store %arg11[%c0_17, %c0_18], %19 {strides = array<i32>} : memref<8x256xf32, #tpu.memory_space<vmem>>, vector<8x256xf32>,
    } else {
    }
    %c0 = arith.constant 0 : index
    %c0_1 = arith.constant 0 : index
    %3 = vector.load %arg2[%c0, %c0_1] : memref<8x128xf32, #tpu.memory_space<vmem>>, vector<8x128xf32>
    %c0_2 = arith.constant 0 : index
    %c0_3 = arith.constant 0 : index
    %4 = vector.load %arg3[%c0_2, %c0_3] : memref<128x128xf32, #tpu.memory_space<vmem>>, vector<128x128xf32>
    %cst = arith.constant dense<0.000000e+00> : vector<8x128xf32>
    %5 = tpu.matmul %3, %4, %cst {dimension_numbers = #tpu.dot_dimension_numbers<[1], [0], [0], [1], [0, 0, 1, 1], [], []>} : vector<8x128xf32>, vector<128x128xf32>, vector<8x128xf32> -> vector<8x128xf32>
    %c0_4 = arith.constant 0 : index
    %c0_5 = arith.constant 0 : index
    %6 = vector.load %arg4[%c0_4, %c0_5] : memref<1x128xf32, #tpu.memory_space<vmem>>, vector<1x128xf32>
    %7 = vector.broadcast %6 : vector<1x128xf32> to vector<8x128xf32>
    %8 = arith.addf %5, %7 : vector<8x128xf32>
    %cst_6 = arith.constant 0.000000e+00 : f32
    %9 = vector.broadcast %cst_6 : f32 to vector<8x128xf32>
    %10 = arith.maximumf %8, %9 : vector<8x128xf32>
    %c0_7 = arith.constant 0 : index
    %c0_8 = arith.constant 0 : index
    %11 = vector.load %arg11[%c0_7, %c0_8] : memref<8x256xf32, #tpu.memory_space<vmem>>, vector<8x256xf32>
    %c0_9 = arith.constant 0 : index
    %c0_10 = arith.constant 0 : index
    %12 = vector.load %arg5[%c0_9, %c0_10] : memref<128x256xf32, #tpu.memory_space<vmem>>, vector<128x256xf32>
    %cst_11 = arith.constant dense<0.000000e+00> : vector<8x256xf32>
    %13 = tpu.matmul %10, %12, %cst_11 {dimension_numbers = #tpu.dot_dimension_numbers<[1], [0], [0], [1], [0, 0, 1, 1], [], []>} : vector<8x128xf32>, vector<128x256xf32>, vector<8x256xf32> -> vector<8x256xf32>
    %14 = arith.addf %11, %13 : vector<8x256xf32>
    %c0_12 = arith.constant 0 : index
    %c0_13 = arith.constant 0 : index
    %15 = vector.load %arg11[%c0_12, %c0_13] : memref<8x256xf32, #tpu.memory_space<vmem>>, vector<8x256xf32>
    tpu.vector_store %arg11[%c0_12, %c0_13], %14 {strides = array<i32>} : memref<8x256xf32, #tpu.memory_space<vmem>>, vector<8x256xf32>,
    %c0_i32_14 = arith.constant 0 : i32
    %16 = arith.cmpi eq, %arg1, %c0_i32_14 : i32
    %17 = arith.extui %16 : i1 to i32
    %c0_i32_15 = arith.constant 0 : i32
    %18 = arith.cmpi ne, %17, %c0_i32_15 : i32
    scf.if %18 {
      %c0_16 = arith.constant 0 : index
      %c0_17 = arith.constant 0 : index
      %19 = vector.load %arg11[%c0_16, %c0_17] : memref<8x256xf32, #tpu.memory_space<vmem>>, vector<8x256xf32>
      %c0_18 = arith.constant 0 : index
      %c0_19 = arith.constant 0 : index
      %20 = vector.load %arg6[%c0_18, %c0_19] : memref<1x256xf32, #tpu.memory_space<vmem>>, vector<1x256xf32>
      %21 = vector.broadcast %20 : vector<1x256xf32> to vector<8x256xf32>
      %22 = arith.addf %19, %21 : vector<8x256xf32>
      %23 = vector.extract_strided_slice %22 {offsets = [0, 0], sizes = [8, 128], strides = [1, 1]} : vector<8x256xf32> to vector<8x128xf32>
      %24 = vector.extract_strided_slice %22 {offsets = [0, 128], sizes = [8, 128], strides = [1, 1]} : vector<8x256xf32> to vector<8x128xf32>
      %c0_20 = arith.constant 0 : index
      %c0_21 = arith.constant 0 : index
      %25 = vector.load %arg9[%c0_20, %c0_21] : memref<8x128xf32, #tpu.memory_space<vmem>>, vector<8x128xf32>
      tpu.vector_store %arg9[%c0_20, %c0_21], %23 {strides = array<i32>} : memref<8x128xf32, #tpu.memory_space<vmem>>, vector<8x128xf32>,
      %c0_22 = arith.constant 0 : index
      %c0_23 = arith.constant 0 : index
      %26 = vector.load %arg10[%c0_22, %c0_23] : memref<8x128xf32, #tpu.memory_space<vmem>>, vector<8x128xf32>
      tpu.vector_store %arg10[%c0_22, %c0_23], %24 {strides = array<i32>} : memref<8x128xf32, #tpu.memory_space<vmem>>, vector<8x128xf32>,
      %cst_24 = arith.constant 5.000000e-01 : f32
      %27 = vector.broadcast %cst_24 : f32 to vector<8x128xf32>
      %28 = arith.mulf %27, %24 : vector<8x128xf32>
      %29 = math.exp %28 : vector<8x128xf32>
      %c0_25 = arith.constant 0 : index
      %c0_26 = arith.constant 0 : index
      %30 = vector.load %arg7[%c0_25, %c0_26] : memref<8x128xf32, #tpu.memory_space<vmem>>, vector<8x128xf32>
      %31 = arith.mulf %30, %29 : vector<8x128xf32>
      %32 = arith.addf %31, %23 : vector<8x128xf32>
      %c0_27 = arith.constant 0 : index
      %c0_28 = arith.constant 0 : index
      %33 = vector.load %arg8[%c0_27, %c0_28] : memref<8x128xf32, #tpu.memory_space<vmem>>, vector<8x128xf32>
      tpu.vector_store %arg8[%c0_27, %c0_28], %32 {strides = array<i32>} : memref<8x128xf32, #tpu.memory_space<vmem>>, vector<8x128xf32>,
    } else {
    }
    return
  }
  func.func @transform_0(%arg0: i32, %arg1: i32) -> (i32, i32) {
    %c0_i32 = arith.constant 0 : i32
    %c0_i32_0 = arith.constant 0 : i32
    return %arg0, %c0_i32 : i32, i32
  }
  func.func @transform_1(%arg0: i32, %arg1: i32) -> (i32, i32) {
    %c0_i32 = arith.constant 0 : i32
    %c0_i32_0 = arith.constant 0 : i32
    return %c0_i32, %arg1 : i32, i32
  }
  func.func @transform_2(%arg0: i32, %arg1: i32) -> (i32, i32) {
    %c0_i32 = arith.constant 0 : i32
    %c0_i32_0 = arith.constant 0 : i32
    return %c0_i32, %arg1 : i32, i32
  }
  func.func @transform_3(%arg0: i32, %arg1: i32) -> (i32, i32) {
    %c0_i32 = arith.constant 0 : i32
    %c0_i32_0 = arith.constant 0 : i32
    return %arg1, %c0_i32 : i32, i32
  }
  func.func @transform_4(%arg0: i32, %arg1: i32) -> (i32, i32) {
    %c0_i32 = arith.constant 0 : i32
    %c0_i32_0 = arith.constant 0 : i32
    %c0_i32_1 = arith.constant 0 : i32
    return %c0_i32, %c0_i32_0 : i32, i32
  }
  func.func @transform_5(%arg0: i32, %arg1: i32) -> (i32, i32) {
    %c0_i32 = arith.constant 0 : i32
    %c0_i32_0 = arith.constant 0 : i32
    return %arg0, %c0_i32 : i32, i32
  }
  func.func @transform_6(%arg0: i32, %arg1: i32) -> (i32, i32) {
    %c0_i32 = arith.constant 0 : i32
    %c0_i32_0 = arith.constant 0 : i32
    return %arg0, %c0_i32 : i32, i32
  }
  func.func @transform_7(%arg0: i32, %arg1: i32) -> (i32, i32) {
    %c0_i32 = arith.constant 0 : i32
    %c0_i32_0 = arith.constant 0 : i32
    return %arg0, %c0_i32 : i32, i32
  }
  func.func @transform_8(%arg0: i32, %arg1: i32) -> (i32, i32) {
    %c0_i32 = arith.constant 0 : i32
    %c0_i32_0 = arith.constant 0 : i32
    return %arg0, %c0_i32 : i32, i32
  }
}

</mosaic_0001>

<llo_original>
// kernel: vae_encoder_forward.1
$region0: #{vae_encoder_forward.1}
  #allocation0 [shape = 'u32[]', space=smem, size = 0x4, offset = 0x4, fixed_abs, tag = 'smem constant byte address 0x4 - core index']
  #allocation1 [shape = 'u32[72,128]{1,0:T(1,128)}', space=vmem, size = 0x9000, scoped, tag = 'internal scratch']
  #allocation2 [shape = 'f32[8,256]{1,0:T(8,128)}', space=vmem, size = 0x2000, scoped, tag = 'scratch operand']
  %s0 = inlined_call_operand.vmem [shape: f32[8,128], index: 0, kind: input, shape index: {}]
  %s1 = inlined_call_operand.hbm [shape: f32[128,128], index: 1, kind: input, shape index: {}]
  %s2 = inlined_call_operand.vmem [shape: f32[1,128], index: 2, kind: input, shape index: {}]
  %s3 = inlined_call_operand.hbm [shape: f32[128,256], index: 3, kind: input, shape index: {}]
  %s4 = inlined_call_operand.vmem [shape: f32[1,256], index: 4, kind: input, shape index: {}]
  %s5 = inlined_call_operand.vmem [shape: f32[8,128], index: 5, kind: input, shape index: {}]
  %s6 = inlined_call_operand.hbm [shape: f32[8,128], index: 6, kind: output, shape index: {0}]
  %s7 = inlined_call_operand.hbm [shape: f32[8,128], index: 7, kind: output, shape index: {1}]
  %s8 = inlined_call_operand.hbm [shape: f32[8,128], index: 8, kind: output, shape index: {2}]
  %9 = xla_tuple %s6, %s7, %s8
  %s10 = sld [smem:[#allocation0]]
  $region66: #{vae_encoder_forward.1} parent=0
    _
  %s12 = ssub.s32 1, %s10
  %s13 = scalar_select 0, %s12, %s10
  $region1: #{vae_encoder_forward.1} parent=0
    #allocation3 [shape = 'u8[65536]{0}', space=vmem, size = 0x10000, scoped, tag = 'input window, operand 1, single buffered']
    #allocation4 [shape = 's32[1]{0}', space=sflag, size = 0x4, scoped, tag = 'scoped memory for vae_encoder_forward.1']
    #allocation5 [shape = 's32[1]{0}', space=sflag, size = 0x4, scoped, tag = 'scoped memory for vae_encoder_forward.1']
    #allocation6 [shape = 'u8[131072]{0}', space=vmem, size = 0x20000, scoped, tag = 'input window, operand 3, single buffered']
    #allocation7 [shape = 's32[1]{0}', space=sflag, size = 0x4, scoped, tag = 'scoped memory for vae_encoder_forward.1']
    #allocation8 [shape = 'u8[4096]{0}', space=vmem, size = 0x1000, scoped, tag = 'output window, operand 0, single buffered']
    #allocation9 [shape = 'u8[4096]{0}', space=vmem, size = 0x1000, scoped, tag = 'output window, operand 1, single buffered']
    #allocation10 [shape = 's32[1]{0}', space=sflag, size = 0x4, scoped, tag = 'scoped memory for vae_encoder_forward.1']
    #allocation11 [shape = 'u8[4096]{0}', space=vmem, size = 0x1000, scoped, tag = 'output window, operand 2, single buffered']
    %14 = vsyncpa [#allocation4], 0
    %15 = vsyncpa [#allocation7], 0
    %16 = vsyncpa [#allocation5], 0
    %17 = vsyncpa [#allocation10], 0
    // Predicated region
    $region2: #{vae_encoder_forward.1} parent=1 // pred_check
      _
    $region3: #{vae_encoder_forward.1} parent=1 // pred_check_branch
      %19 = sbr.rel (0) target = $region5
    $region4: #{vae_encoder_forward.1} parent=1 // pred_region
      _
    $region5: #{vae_encoder_forward.1} parent=1 // pred_fallthru
      _
    // Predicated region
    $region6: #{vae_encoder_forward.1} parent=1 // pred_check
      _
    $region7: #{vae_encoder_forward.1} parent=1 // pred_check_branch
      %21 = sbr.rel (0) target = $region9
    $region8: #{vae_encoder_forward.1} parent=1 // pred_region
      %23 = vsyncadd [#allocation4], 0
      %s24 = sshll.u32 %s1, 4
      %s25 = int_to_ptr.hbm [resolvable:$true] %s24
      %s26 = sshll.u32 [#allocation3], 4
      %s27 = int_to_ptr.vmem [resolvable:$true] %s26
      %32 = dma.hbm_to_vmem [thread:$0]  %s25, 2048, %s27, [#allocation4], 128, 128, 8
    $region9: #{vae_encoder_forward.1} parent=1 // pred_fallthru
      _
    // Predicated region
    $region10: #{vae_encoder_forward.1} parent=1 // pred_check
      _
    $region11: #{vae_encoder_forward.1} parent=1 // pred_check_branch
      %34 = sbr.rel (0) target = $region13
    $region12: #{vae_encoder_forward.1} parent=1 // pred_region
      _
    $region13: #{vae_encoder_forward.1} parent=1 // pred_fallthru
      _
    // Predicated region
    $region14: #{vae_encoder_forward.1} parent=1 // pred_check
      _
    $region15: #{vae_encoder_forward.1} parent=1 // pred_check_branch
      %36 = sbr.rel (0) target = $region17
    $region16: #{vae_encoder_forward.1} parent=1 // pred_region
      %38 = vsyncadd [#allocation7], 0
      %s39 = sshll.u32 %s3, 4
      %s40 = int_to_ptr.hbm [resolvable:$true] %s39
      %s41 = sshll.u32 [#allocation6], 4
      %s42 = int_to_ptr.vmem [resolvable:$true] %s41
      %47 = dma.hbm_to_vmem [thread:$0]  %s40, 4096, %s42, [#allocation7], 256, 256, 16
    $region17: #{vae_encoder_forward.1} parent=1 // pred_fallthru
      _
    // Predicated region
    $region18: #{vae_encoder_forward.1} parent=1 // pred_check
      _
    $region19: #{vae_encoder_forward.1} parent=1 // pred_check_branch
      %49 = sbr.rel (0) target = $region21
    $region20: #{vae_encoder_forward.1} parent=1 // pred_region
      _
    $region21: #{vae_encoder_forward.1} parent=1 // pred_fallthru
      _
    // Predicated region
    $region22: #{vae_encoder_forward.1} parent=1 // pred_check
      _
    $region23: #{vae_encoder_forward.1} parent=1 // pred_check_branch
      %51 = sbr.rel (0) target = $region25
    $region24: #{vae_encoder_forward.1} parent=1 // pred_region
      _
    $region25: #{vae_encoder_forward.1} parent=1 // pred_fallthru
      _
    // Predicated region
    $region26: #{vae_encoder_forward.1} parent=1 // pred_check
      _
    $region27: #{vae_encoder_forward.1} parent=1 // pred_check_branch
      %53 = sbr.rel (0) target = $region29
    $region28: #{vae_encoder_forward.1} parent=1 // pred_region
      %55 = dma.done [#allocation4], 2048
    $region29: #{vae_encoder_forward.1} parent=1 // pred_fallthru
      _
    // Predicated region
    $region30: #{vae_encoder_forward.1} parent=1 // pred_check
      _
    $region31: #{vae_encoder_forward.1} parent=1 // pred_check_branch
      %57 = sbr.rel (0) target = $region33
    $region32: #{vae_encoder_forward.1} parent=1 // pred_region
      %59 = dma.done [#allocation7], 4096
    $region33: #{vae_encoder_forward.1} parent=1 // pred_fallthru
      _
    %p60 = scmp.eq.s32.totalorder 0, 0
    // Predicated region
    $region34: #{vae_encoder_forward.1} parent=1 // pred_check
      %p61 = pneg %p60
    $region35: #{vae_encoder_forward.1} parent=1 // pred_check_branch
      %63 = sbr.rel (%p61) target = $region37
    $region36: #{vae_encoder_forward.1} parent=1 // pred_region
      %64 = vst [vmem:[#allocation2] sm:$0xff] 0.0
      %65 = vst [vmem:[#allocation2 + $0x8] sm:$0xff] 0.0
    $region37: #{vae_encoder_forward.1} parent=1 // pred_fallthru
      _
    %v66 = vld [vmem:[%s0] sm:$0xff]
    %v67 = vld [vmem:[#allocation3] sm:$0xff]
    %v68 = vld [vmem:[#allocation3 + $0x8] sm:$0xff]
    %v69 = vld [vmem:[#allocation3 + $0x10] sm:$0xff]
    %v70 = vld [vmem:[#allocation3 + $0x18] sm:$0xff]
    %v71 = vld [vmem:[#allocation3 + $0x20] sm:$0xff]
    %v72 = vld [vmem:[#allocation3 + $0x28] sm:$0xff]
    %v73 = vld [vmem:[#allocation3 + $0x30] sm:$0xff]
    %v74 = vld [vmem:[#allocation3 + $0x38] sm:$0xff]
    %v75 = vld [vmem:[#allocation3 + $0x40] sm:$0xff]
    %v76 = vld [vmem:[#allocation3 + $0x48] sm:$0xff]
    %v77 = vld [vmem:[#allocation3 + $0x50] sm:$0xff]
    %v78 = vld [vmem:[#allocation3 + $0x58] sm:$0xff]
    %v79 = vld [vmem:[#allocation3 + $0x60] sm:$0xff]
    %v80 = vld [vmem:[#allocation3 + $0x68] sm:$0xff]
    %v81 = vld [vmem:[#allocation3 + $0x70] sm:$0xff]
    %v82 = vld [vmem:[#allocation3 + $0x78] sm:$0xff]
    %v83 = vld [vmem:[%s2] sm:$0x1]
    %v85 = vperm.slane %v83, 0
    %87 = vmatpush.msra.mxu0 %v82
    %88 = vmatpush.msra.mxu0 %v81
    %89 = vmatpush.msra.mxu0 %v80
    %90 = vmatpush.msra.mxu0 %v79
    %91 = vmatpush.msra.mxu0 %v78
    %92 = vmatpush.msra.mxu0 %v77
    %93 = vmatpush.msra.mxu0 %v76
    %94 = vmatpush.msra.mxu0 %v75
    %95 = vmatpush.msra.mxu0 %v74
    %96 = vmatpush.msra.mxu0 %v73
    %97 = vmatpush.msra.mxu0 %v72
    %98 = vmatpush.msra.mxu0 %v71
    %99 = vmatpush.msra.mxu0 %v70
    %100 = vmatpush.msra.mxu0 %v69
    %101 = vmatpush.msra.mxu0 %v68
    %102 = vmatpush.msra.mxu0 %v67
    %103 = vmatmul.f32.gmra.mxu0 %v66
    %v104 = vpop.f32.mrf.mxu0
    %v105 = vadd.f32 %v85, %v104
    %106 = vdwg.mxu0
    %v107 = vmax.f32 %v105, 0.0
    %v108 = vld [vmem:[#allocation2] sm:$0xff]
    %v109 = vld [vmem:[#allocation2 + $0x8] sm:$0xff]
    %v110 = vld [vmem:[#allocation6] sm:$0xff]
    %v111 = vld [vmem:[#allocation6 + $0x8] sm:$0xff]
    %v112 = vld [vmem:[#allocation6 + $0x10] sm:$0xff]
    %v113 = vld [vmem:[#allocation6 + $0x18] sm:$0xff]
    %v114 = vld [vmem:[#allocation6 + $0x20] sm:$0xff]
    %v115 = vld [vmem:[#allocation6 + $0x28] sm:$0xff]
    %v116 = vld [vmem:[#allocation6 + $0x30] sm:$0xff]
    %v117 = vld [vmem:[#allocation6 + $0x38] sm:$0xff]
    %v118 = vld [vmem:[#allocation6 + $0x40] sm:$0xff]
    %v119 = vld [vmem:[#allocation6 + $0x48] sm:$0xff]
    %v120 = vld [vmem:[#allocation6 + $0x50] sm:$0xff]
    %v121 = vld [vmem:[#allocation6 + $0x58] sm:$0xff]
    %v122 = vld [vmem:[#allocation6 + $0x60] sm:$0xff]
    %v123 = vld [vmem:[#allocation6 + $0x68] sm:$0xff]
    %v124 = vld [vmem:[#allocation6 + $0x70] sm:$0xff]
    %v125 = vld [vmem:[#allocation6 + $0x78] sm:$0xff]
    %v126 = vld [vmem:[#allocation6 + $0x80] sm:$0xff]
    %v127 = vld [vmem:[#allocation6 + $0x88] sm:$0xff]
    %v128 = vld [vmem:[#allocation6 + $0x90] sm:$0xff]
    %v129 = vld [vmem:[#allocation6 + $0x98] sm:$0xff]
    %v130 = vld [vmem:[#allocation6 + $0xa0] sm:$0xff]
    %v131 = vld [vmem:[#allocation6 + $0xa8] sm:$0xff]
    %v132 = vld [vmem:[#allocation6 + $0xb0] sm:$0xff]
    %v133 = vld [vmem:[#allocation6 + $0xb8] sm:$0xff]
    %v134 = vld [vmem:[#allocation6 + $0xc0] sm:$0xff]
    %v135 = vld [vmem:[#allocation6 + $0xc8] sm:$0xff]
    %v136 = vld [vmem:[#allocation6 + $0xd0] sm:$0xff]
    %v137 = vld [vmem:[#allocation6 + $0xd8] sm:$0xff]
    %v138 = vld [vmem:[#allocation6 + $0xe0] sm:$0xff]
    %v139 = vld [vmem:[#allocation6 + $0xe8] sm:$0xff]
    %v140 = vld [vmem:[#allocation6 + $0xf0] sm:$0xff]
    %v141 = vld [vmem:[#allocation6 + $0xf8] sm:$0xff]
    %142 = vmatpush.msra.mxu0 %v140
    %143 = vmatpush.msra.mxu0 %v138
    %144 = vmatpush.msra.mxu0 %v136
    %145 = vmatpush.msra.mxu0 %v134
    %146 = vmatpush.msra.mxu0 %v132
    %147 = vmatpush.msra.mxu0 %v130
    %148 = vmatpush.msra.mxu0 %v128
    %149 = vmatpush.msra.mxu0 %v126
    %150 = vmatpush.msra.mxu0 %v124
    %151 = vmatpush.msra.mxu0 %v122
    %152 = vmatpush.msra.mxu0 %v120
    %153 = vmatpush.msra.mxu0 %v118
    %154 = vmatpush.msra.mxu0 %v116
    %155 = vmatpush.msra.mxu0 %v114
    %156 = vmatpush.msra.mxu0 %v112
    %157 = vmatpush.msra.mxu0 %v110
    %158 = vmatmul.f32.gmra.mxu0 %v107
    %v159 = vpop.f32.mrf.mxu0
    %v160 = vadd.f32 0.0, %v159
    %161 = vdwg.mxu0
    %162 = vmatpush.msra.mxu0 %v141
    %163 = vmatpush.msra.mxu0 %v139
    %164 = vmatpush.msra.mxu0 %v137
    %165 = vmatpush.msra.mxu0 %v135
    %166 = vmatpush.msra.mxu0 %v133
    %167 = vmatpush.msra.mxu0 %v131
    %168 = vmatpush.msra.mxu0 %v129
    %169 = vmatpush.msra.mxu0 %v127
    %170 = vmatpush.msra.mxu0 %v125
    %171 = vmatpush.msra.mxu0 %v123
    %172 = vmatpush.msra.mxu0 %v121
    %173 = vmatpush.msra.mxu0 %v119
    %174 = vmatpush.msra.mxu0 %v117
    %175 = vmatpush.msra.mxu0 %v115
    %176 = vmatpush.msra.mxu0 %v113
    %177 = vmatpush.msra.mxu0 %v111
    %178 = vmatmul.f32.gmra.mxu0 %v107
    %v179 = vpop.f32.mrf.mxu0
    %v180 = vadd.f32 0.0, %v179
    %181 = vdwg.mxu0
    %v182 = vadd.f32 %v108, %v160
    %v183 = vadd.f32 %v109, %v180
    %184 = vst [vmem:[#allocation2] sm:$0xff] %v182
    %185 = vst [vmem:[#allocation2 + $0x8] sm:$0xff] %v183
    // Predicated region
    $region38: #{vae_encoder_forward.1} parent=1 // pred_check
      %p186 = pneg %p60
    $region39: #{vae_encoder_forward.1} parent=1 // pred_check_branch
      %188 = sbr.rel (%p186) target = $region41
    $region40: #{vae_encoder_forward.1} parent=1 // pred_region
      %v189 = vld [vmem:[#allocation2] sm:$0xff]
      %v190 = vld [vmem:[#allocation2 + $0x8] sm:$0xff]
      %v191 = vld [vmem:[%s4] sm:$0x3]
      %v193 = vperm.slane %v191, 0
      %v194 = vperm.slane %v191, 1
      %v197 = vadd.f32 %v189, %v193
      %v198 = vadd.f32 %v190, %v194
      %199 = vst [vmem:[#allocation9] sm:$0xff] %v197
      %200 = vst [vmem:[#allocation11] sm:$0xff] %v198
      %v201 = vmul.f32 %v198, 0.5
      %v202 = vmul.f32 %v201, 1.442695
      %v203 = vpow.pop %v202
      %v204 = vld [vmem:[%s5] sm:$0xff]
      %v205 = vmul.f32 %v204, %v203
      %v206 = vadd.f32 %v205, %v197
      %207 = vst [vmem:[#allocation8] sm:$0xff] %v206
    $region41: #{vae_encoder_forward.1} parent=1 // pred_fallthru
      _
    // Predicated region
    $region42: #{vae_encoder_forward.1} parent=1 // pred_check
      _
    $region43: #{vae_encoder_forward.1} parent=1 // pred_check_branch
      %209 = sbr.rel (0) target = $region45
    $region44: #{vae_encoder_forward.1} parent=1 // pred_region
      %211 = vsyncadd [#allocation5], 0
      %s213 = sshll.u32 [#allocation8], 4
      %s214 = int_to_ptr.vmem [resolvable:$true] %s213
      %s215 = sshll.u32 %s6, 4
      %s216 = int_to_ptr.hbm [resolvable:$true] %s215
      %218 = dma.vmem_to_hbm [thread:$0]  %s214, 128, %s216, [#allocation5]
    $region45: #{vae_encoder_forward.1} parent=1 // pred_fallthru
      _
    // Predicated region
    $region46: #{vae_encoder_forward.1} parent=1 // pred_check
      _
    $region47: #{vae_encoder_forward.1} parent=1 // pred_check_branch
      %220 = sbr.rel (0) target = $region49
    $region48: #{vae_encoder_forward.1} parent=1 // pred_region
      %222 = vsyncadd [#allocation10], 0
      %s224 = sshll.u32 [#allocation9], 4
      %s225 = int_to_ptr.vmem [resolvable:$true] %s224
      %s226 = sshll.u32 %s7, 4
      %s227 = int_to_ptr.hbm [resolvable:$true] %s226
      %229 = dma.vmem_to_hbm [thread:$0]  %s225, 128, %s227, [#allocation10]
    $region49: #{vae_encoder_forward.1} parent=1 // pred_fallthru
      _
    // Predicated region
    $region50: #{vae_encoder_forward.1} parent=1 // pred_check
      _
    $region51: #{vae_encoder_forward.1} parent=1 // pred_check_branch
      %231 = sbr.rel (0) target = $region53
    $region52: #{vae_encoder_forward.1} parent=1 // pred_region
      %233 = vsyncadd [#allocation10], 0
      %s235 = sshll.u32 [#allocation11], 4
      %s236 = int_to_ptr.vmem [resolvable:$true] %s235
      %s237 = sshll.u32 %s8, 4
      %s238 = int_to_ptr.hbm [resolvable:$true] %s237
      %240 = dma.vmem_to_hbm [thread:$0]  %s236, 128, %s238, [#allocation10]
    $region53: #{vae_encoder_forward.1} parent=1 // pred_fallthru
      _
    // Predicated region
    $region54: #{vae_encoder_forward.1} parent=1 // pred_check
      _
    $region55: #{vae_encoder_forward.1} parent=1 // pred_check_branch
      %242 = sbr.rel (0) target = $region57
    $region56: #{vae_encoder_forward.1} parent=1 // pred_region
      %244 = dma.done [#allocation5], 128
    $region57: #{vae_encoder_forward.1} parent=1 // pred_fallthru
      _
    // Predicated region
    $region58: #{vae_encoder_forward.1} parent=1 // pred_check
      _
    $region59: #{vae_encoder_forward.1} parent=1 // pred_check_branch
      %246 = sbr.rel (0) target = $region61
    $region60: #{vae_encoder_forward.1} parent=1 // pred_region
      %248 = dma.done [#allocation10], 128
    $region61: #{vae_encoder_forward.1} parent=1 // pred_fallthru
      _
    // Predicated region
    $region62: #{vae_encoder_forward.1} parent=1 // pred_check
      _
    $region63: #{vae_encoder_forward.1} parent=1 // pred_check_branch
      %250 = sbr.rel (0) target = $region65
    $region64: #{vae_encoder_forward.1} parent=1 // pred_region
      %252 = dma.done [#allocation10], 128
    $region65: #{vae_encoder_forward.1} parent=1 // pred_fallthru
      _
    %253 = vsyncpa [#allocation4], 1
    %254 = vsyncpa [#allocation7], 1
    %255 = vsyncpa [#allocation5], 1
    %256 = vsyncpa [#allocation10], 1

</llo_original>
